<compile_context>
chip_gen: v6e
topology: v6e:2x2x1
jax: 0.10.0
libtpu: 0.0.40
codegen_flags: <defaults>
</compile_context>

<pallas_src>
import functools

import jax
import jax.numpy as jnp
from jax.experimental import pallas as pl
from jax.experimental.pallas import tpu as pltpu


def _gap_to_abs_kernel(x_ref, w1_ref, b1_ref, w2_ref, o_ref, *, n_atoms):
    """x_ref: (tm*A, F) bf16; w1: (F, 2H) bf16; b1/w2: (1, 2H) f32; o: (1, tm) f32."""
    tm = o_ref.shape[-1]
    h2 = w1_ref.shape[-1]

    # Fused first layer of BOTH heads on the MXU, f32 accumulation.
    h = jnp.dot(x_ref[...], w1_ref[...], preferred_element_type=jnp.float32)
    h = h + b1_ref[...]
    h = h * jax.nn.sigmoid(h)                                   # SiLU (f32, EUP+VPU)

    # Atom pooling commutes with the linear second layer: pool over atoms first
    # (A == 8 keeps the reshape a sublane-aligned layout no-op), then do the
    # width-1 projection as a VPU multiply + lane reduce (MXU not needed).
    h_pool = jnp.sum(h.reshape(tm, n_atoms, h2), axis=1)        # (tm, 2H)
    e_col = jnp.sum(h_pool * w2_ref[...], axis=-1, keepdims=True)  # (tm, 1)

    # Lane-dense store: move per-molecule energies from sublanes to lanes
    # (cheap XLU relayout in a mem-bound kernel) so the writeback DMA is
    # tm*4 bytes wide instead of 4 bytes.
    o_ref[...] = jnp.transpose(e_col).astype(o_ref.dtype)       # (1, tm)


def _round_up(v, m):
    return ((v + m - 1) // m) * m


def painn_gap_to_abs(x, ground_params, gap_params, subtract_gap, *,
                     tile_m=2048, compute_dtype=jnp.bfloat16):
    """Run both sub-model readout heads fused in a single Pallas call."""
    factor = -1.0 if subtract_gap else 1.0
    M, A, F = x.shape
    H = ground_params["w1"].shape[1]
    H2 = 2 * H

    # ---- head fusion (static, done once in JAX outside the kernel) ----
    w1_cat = jnp.concatenate([ground_params["w1"], gap_params["w1"]], axis=1)       # (F, 2H)
    b1_cat = jnp.concatenate([ground_params["b1"], gap_params["b1"]], axis=1)       # (1, 2H)
    w2_row = jnp.concatenate(
        [ground_params["w2"], factor * gap_params["w2"]], axis=0).reshape(1, H2)    # (1, 2H)
    b2_scalar = (A * (ground_params["b2"] + factor * gap_params["b2"])).reshape(())  # scalar

    # ---- bf16 HBM stream for the big operands; biases / w2 stay f32 ----
    x_flat = x.reshape(M * A, F).astype(compute_dtype)   # flatten hoisted out of the kernel
    w1_cat = w1_cat.astype(compute_dtype)
    b1_cat = b1_cat.astype(jnp.float32)
    w2_row = w2_row.astype(jnp.float32)

    # ---- molecule tiling ----
    # tile_m is a multiple of 128 so lane-dense output blocks are always legal.
    # Small M -> one block (per-step overhead dominates); larger M -> >=2 tiles
    # so v7x's two TensorCores + double buffering are used; huge M -> tile_m.
    assert tile_m % 128 == 0, "tile_m must be a multiple of 128"
    if M < 1024:
        tm = M
    else:
        n_tiles = max(2, pl.cdiv(M, tile_m))
        tm = min(_round_up(pl.cdiv(M, n_tiles), 128), tile_m)
    grid_m = pl.cdiv(M, tm)

    itemsize = jnp.dtype(compute_dtype).itemsize
    cost = pl.CostEstimate(
        flops=2 * M * A * F * H2 + 5 * M * A * H2 + 2 * M * H2,
        transcendentals=M * A * H2,
        bytes_accessed=(x_flat.size * itemsize + w1_cat.size * itemsize
                        + 4 * (b1_cat.size + w2_row.size + grid_m * tm)),
    )

    out = pl.pallas_call(
        functools.partial(_gap_to_abs_kernel, n_atoms=A),
        out_shape=jax.ShapeDtypeStruct((1, grid_m * tm), jnp.float32),
        grid=(grid_m,),
        in_specs=[
            pl.BlockSpec((tm * A, F), lambda i: (i, 0)),   # x tile (flattened atoms)
            pl.BlockSpec((F, H2), lambda i: (0, 0)),       # w1_cat (replicated)
            pl.BlockSpec((1, H2), lambda i: (0, 0)),       # b1_cat (replicated)
            pl.BlockSpec((1, H2), lambda i: (0, 0)),       # w2_row (replicated)
        ],
        out_specs=pl.BlockSpec((1, tm), lambda i: (0, i)),  # lane-dense energy row
        compiler_params=pltpu.CompilerParams(
            dimension_semantics=("parallel",),
            vmem_limit_bytes=32 * 1024 * 1024,   # fits tile_m=2048 incl. lane padding on v7x
        ),
        cost_estimate=cost,
    )(x_flat, w1_cat, b1_cat, w2_row)

    # Drop tile padding, restore (M, 1), and fold in the combined b2 term.
    energy = out.reshape(-1)[:M].reshape(M, 1) + b2_scalar

    # common pooled key (present in both models' pool_dic)
    return {"energy": energy}


def _make_readout_params(key, feat, hidden):
    k1, k2, k3, k4 = jax.random.split(key, 4)
    return {
        "w1": jax.random.normal(k1, (feat, hidden), jnp.float32) / jnp.sqrt(feat),
        "b1": 0.1 * jax.random.normal(k3, (1, hidden), jnp.float32),
        "w2": jax.random.normal(k2, (hidden, 1), jnp.float32) / jnp.sqrt(hidden),
        "b2": 0.1 * jax.random.normal(k4, (1, 1), jnp.float32),
    }


def _reference(x, ground_params, gap_params, subtract_gap, compute_dtype=jnp.bfloat16):
    """Pure-JAX reference with the same bf16 input quantization as the kernel."""
    factor = -1.0 if subtract_gap else 1.0
    xq = x.astype(compute_dtype).astype(jnp.float32)

    def readout(p):
        w1q = p["w1"].astype(compute_dtype).astype(jnp.float32)
        h = xq @ w1q + p["b1"]
        h = h * jax.nn.sigmoid(h)
        e_atom = h @ p["w2"] + p["b2"]          # (M, A, 1)
        return jnp.sum(e_atom, axis=1)          # (M, 1)

    return readout(ground_params) + factor * readout(gap_params)


if __name__ == "__main__":
    n_mol, n_atoms, feat, hidden = 2, 8, 32, 16

    key = jax.random.PRNGKey(0)
    kx, kg, kp = jax.random.split(key, 3)

    x = jax.random.normal(kx, (n_mol, n_atoms, feat), jnp.float32)
    ground_params = _make_readout_params(kg, feat, hidden)
    gap_params = _make_readout_params(kp, feat, hidden)

    subtract_gap = True  # predict lower state: E_abs = E_ground - E_gap
    results = painn_gap_to_abs(x, ground_params, gap_params, subtract_gap)
    energy = jax.block_until_ready(results["energy"])

    ref = _reference(x, ground_params, gap_params, subtract_gap)
    assert energy.shape == (n_mol, 1)
    assert jnp.allclose(energy, ref, atol=1e-3, rtol=1e-3), (energy, ref)

    print("KERNEL_OK")
</pallas_src>

<mosaic_0001>
module attributes {stable_mosaic.version = 11 : i64} {
  func.func @_gap_to_abs_kernel(%arg0: i32, %arg1: memref<16x32xbf16, #tpu.memory_space<vmem>>, %arg2: memref<32x32xbf16, #tpu.memory_space<vmem>>, %arg3: memref<1x32xf32, #tpu.memory_space<vmem>>, %arg4: memref<1x32xf32, #tpu.memory_space<vmem>>, %arg5: memref<1x2xf32, #tpu.memory_space<vmem>>) attributes {dimension_semantics = [#tpu.dimension_semantics<parallel>], iteration_bounds = array<i64: 1>, scalar_prefetch = 0 : i64, scratch_operands = 0 : i64, tpu.core_type = #tpu.core_type<tc>, window_params = [{transform_indices = @transform_0, window_bounds = array<i64: 16, 32>}, {pipeline_mode = #tpu.pipeline_mode<synchronous>, transform_indices = @transform_1, window_bounds = array<i64: 32, 32>}, {pipeline_mode = #tpu.pipeline_mode<synchronous>, transform_indices = @transform_2, window_bounds = array<i64: 1, 32>}, {pipeline_mode = #tpu.pipeline_mode<synchronous>, transform_indices = @transform_3, window_bounds = array<i64: 1, 32>}, {transform_indices = @transform_4, window_bounds = array<i64: 1, 2>}]} {
    %c0 = arith.constant 0 : index
    %c0_0 = arith.constant 0 : index
    %0 = vector.load %arg1[%c0, %c0_0] : memref<16x32xbf16, #tpu.memory_space<vmem>>, vector<16x32xbf16>
    %c0_1 = arith.constant 0 : index
    %c0_2 = arith.constant 0 : index
    %1 = vector.load %arg2[%c0_1, %c0_2] : memref<32x32xbf16, #tpu.memory_space<vmem>>, vector<32x32xbf16>
    %cst = arith.constant dense<0.000000e+00> : vector<16x32xf32>
    %2 = tpu.matmul %0, %1, %cst {dimension_numbers = #tpu.dot_dimension_numbers<[1], [0], [0], [1], [0, 0, 1, 1], [], []>} : vector<16x32xbf16>, vector<32x32xbf16>, vector<16x32xf32> -> vector<16x32xf32>
    %c0_3 = arith.constant 0 : index
    %c0_4 = arith.constant 0 : index
    %3 = vector.load %arg3[%c0_3, %c0_4] : memref<1x32xf32, #tpu.memory_space<vmem>>, vector<1x32xf32>
    %4 = vector.broadcast %3 : vector<1x32xf32> to vector<16x32xf32>
    %5 = arith.addf %2, %4 : vector<16x32xf32>
    %6 = arith.negf %5 : vector<16x32xf32>
    %7 = math.exp %6 : vector<16x32xf32>
    %cst_5 = arith.constant 1.000000e+00 : f32
    %8 = vector.broadcast %cst_5 : f32 to vector<16x32xf32>
    %9 = arith.addf %8, %7 : vector<16x32xf32>
    %10 = arith.divf %8, %9 : vector<16x32xf32>
    %11 = arith.mulf %5, %10 : vector<16x32xf32>
    %12 = vector.shape_cast %11 : vector<16x32xf32> to vector<2x8x32xf32>
    %cst_6 = arith.constant dense<0.000000e+00> : vector<2x32xf32>
    %13 = vector.multi_reduction <add>, %12, %cst_6 [1] : vector<2x8x32xf32> to vector<2x32xf32>
    %c0_7 = arith.constant 0 : index
    %c0_8 = arith.constant 0 : index
    %14 = vector.load %arg4[%c0_7, %c0_8] : memref<1x32xf32, #tpu.memory_space<vmem>>, vector<1x32xf32>
    %15 = vector.broadcast %14 : vector<1x32xf32> to vector<2x32xf32>
    %16 = arith.mulf %13, %15 : vector<2x32xf32>
    %cst_9 = arith.constant dense<0.000000e+00> : vector<2xf32>
    %17 = vector.multi_reduction <add>, %16, %cst_9 [1] : vector<2x32xf32> to vector<2xf32>
    %18 = vector.shape_cast %17 : vector<2xf32> to vector<2x1xf32>
    %19 = tpu.transpose %18, [1, 0] : vector<2x1xf32> -> vector<1x2xf32>
    %c0_10 = arith.constant 0 : index
    %c0_11 = arith.constant 0 : index
    %20 = vector.load %arg5[%c0_10, %c0_11] : memref<1x2xf32, #tpu.memory_space<vmem>>, vector<1x2xf32>
    tpu.vector_store %arg5[%c0_10, %c0_11], %19 {strides = array<i32>} : memref<1x2xf32, #tpu.memory_space<vmem>>, vector<1x2xf32>,
    return
  }
  func.func @transform_0(%arg0: i32) -> (i32, i32) {
    %c0_i32 = arith.constant 0 : i32
    %c0_i32_0 = arith.constant 0 : i32
    return %arg0, %c0_i32 : i32, i32
  }
  func.func @transform_1(%arg0: i32) -> (i32, i32) {
    %c0_i32 = arith.constant 0 : i32
    %c0_i32_0 = arith.constant 0 : i32
    %c0_i32_1 = arith.constant 0 : i32
    return %c0_i32, %c0_i32_0 : i32, i32
  }
  func.func @transform_2(%arg0: i32) -> (i32, i32) {
    %c0_i32 = arith.constant 0 : i32
    %c0_i32_0 = arith.constant 0 : i32
    %c0_i32_1 = arith.constant 0 : i32
    return %c0_i32, %c0_i32_0 : i32, i32
  }
  func.func @transform_3(%arg0: i32) -> (i32, i32) {
    %c0_i32 = arith.constant 0 : i32
    %c0_i32_0 = arith.constant 0 : i32
    %c0_i32_1 = arith.constant 0 : i32
    return %c0_i32, %c0_i32_0 : i32, i32
  }
  func.func @transform_4(%arg0: i32) -> (i32, i32) {
    %c0_i32 = arith.constant 0 : i32
    %c0_i32_0 = arith.constant 0 : i32
    return %c0_i32, %arg0 : i32, i32
  }
}

</mosaic_0001>

<llo_original>
// kernel: tpu_custom_call.1
$region0: #{tpu_custom_call.1}
  #allocation0 [shape = 'u32[]', space=smem, size = 0x4, offset = 0x4, fixed_abs, tag = 'smem constant byte address 0x4 - core index']
  #allocation1 [shape = 'u32[144,128]{1,0:T(1,128)}', space=vmem, size = 0x12000, scoped, tag = 'internal scratch']
  %s0 = inlined_call_operand.hbm [shape: bf16[16,32], index: 0, kind: input, shape index: {}]
  %s1 = inlined_call_operand.hbm [shape: bf16[32,32], index: 1, kind: input, shape index: {}]
  %s2 = inlined_call_operand.vmem [shape: f32[1,32], index: 2, kind: input, shape index: {}]
  %s3 = inlined_call_operand.vmem [shape: f32[1,32], index: 3, kind: input, shape index: {}]
  %s4 = inlined_call_operand.hbm [shape: f32[1,2], index: 4, kind: output, shape index: {}]
  %s5 = sld [smem:[#allocation0]]
  $region34: #{tpu_custom_call.1} parent=0
    _
  %s7 = ssub.s32 1, %s5
  %s8 = scalar_select 0, %s7, %s5
  $region1: #{tpu_custom_call.1} parent=0
    #allocation2 [shape = 'u8[4096]{0}', space=vmem, size = 0x1000, scoped, tag = 'input window, operand 0, single buffered']
    #allocation3 [shape = 's32[1]{0}', space=sflag, size = 0x4, scoped, tag = 'scoped memory for tpu_custom_call.1']
    #allocation4 [shape = 's32[1]{0}', space=sflag, size = 0x4, scoped, tag = 'scoped memory for tpu_custom_call.1']
    #allocation5 [shape = 'u8[8192]{0}', space=vmem, size = 0x2000, scoped, tag = 'input window, operand 1, single buffered']
    #allocation6 [shape = 's32[1]{0}', space=sflag, size = 0x4, scoped, tag = 'scoped memory for tpu_custom_call.1']
    #allocation7 [shape = 'u8[512]{0}', space=vmem, size = 0x400, scoped, tag = 'output window, operand 0, single buffered']
    %9 = vsyncpa [#allocation3], 0
    %10 = vsyncpa [#allocation6], 0
    %11 = vsyncpa [#allocation4], 0
    // Predicated region
    $region2: #{tpu_custom_call.1} parent=1 // pred_check
      _
    $region3: #{tpu_custom_call.1} parent=1 // pred_check_branch
      %13 = sbr.rel (0) target = $region5
    $region4: #{tpu_custom_call.1} parent=1 // pred_region
      %s15 = ssub.s32 128, 128
      %16 = vsyncadd [#allocation3], %s15
      %s17 = sshll.u32 [#allocation2], 4
      %s18 = int_to_ptr.vmem [resolvable:$true] %s17
      %23 = dma.hbm_to_vmem [thread:$0]  %s0, 128, %s18, [#allocation3], 64, 64, 4
    $region5: #{tpu_custom_call.1} parent=1 // pred_fallthru
      _
    // Predicated region
    $region6: #{tpu_custom_call.1} parent=1 // pred_check
      _
    $region7: #{tpu_custom_call.1} parent=1 // pred_check_branch
      %25 = sbr.rel (0) target = $region9
    $region8: #{tpu_custom_call.1} parent=1 // pred_region
      %s27 = ssub.s32 256, 256
      %28 = vsyncadd [#allocation6], %s27
      %s29 = sshll.u32 [#allocation5], 4
      %s30 = int_to_ptr.vmem [resolvable:$true] %s29
      %35 = dma.hbm_to_vmem [thread:$0]  %s1, 256, %s30, [#allocation6], 64, 64, 4
    $region9: #{tpu_custom_call.1} parent=1 // pred_fallthru
      _
    // Predicated region
    $region10: #{tpu_custom_call.1} parent=1 // pred_check
      _
    $region11: #{tpu_custom_call.1} parent=1 // pred_check_branch
      %37 = sbr.rel (0) target = $region13
    $region12: #{tpu_custom_call.1} parent=1 // pred_region
      _
    $region13: #{tpu_custom_call.1} parent=1 // pred_fallthru
      _
    // Predicated region
    $region14: #{tpu_custom_call.1} parent=1 // pred_check
      _
    $region15: #{tpu_custom_call.1} parent=1 // pred_check_branch
      %39 = sbr.rel (0) target = $region17
    $region16: #{tpu_custom_call.1} parent=1 // pred_region
      _
    $region17: #{tpu_custom_call.1} parent=1 // pred_fallthru
      _
    // Predicated region
    $region18: #{tpu_custom_call.1} parent=1 // pred_check
      _
    $region19: #{tpu_custom_call.1} parent=1 // pred_check_branch
      %41 = sbr.rel (0) target = $region21
    $region20: #{tpu_custom_call.1} parent=1 // pred_region
      %42 = dma.done [#allocation3], 128
    $region21: #{tpu_custom_call.1} parent=1 // pred_fallthru
      _
    // Predicated region
    $region22: #{tpu_custom_call.1} parent=1 // pred_check
      _
    $region23: #{tpu_custom_call.1} parent=1 // pred_check_branch
      %44 = sbr.rel (0) target = $region25
    $region24: #{tpu_custom_call.1} parent=1 // pred_region
      %45 = dma.done [#allocation6], 256
    $region25: #{tpu_custom_call.1} parent=1 // pred_fallthru
      _
    %v47 = vld [vmem:[#allocation2] sm:$0xf]
    %v48 = vld [vmem:[#allocation2 + $0x4] sm:$0xf]
    %v49 = vld [vmem:[#allocation5] sm:$0xf]
    %v50 = vld [vmem:[#allocation5 + $0x4] sm:$0xf]
    %v51 = vld [vmem:[#allocation5 + $0x8] sm:$0xf]
    %v52 = vld [vmem:[#allocation5 + $0xc] sm:$0xf]
    %v53 = vld [vmem:[%s2] sm:$0x1]
    %v55 = vlaneseq
    %v56 = vshrl.u32 %v55, 7
    %v57 = vsub.s32 0, %v56
    %v58 = vrot.slane %v53, %v57
    %v62 = vunpack.c.l.b16 %v47
    %v63 = vunpack.c.l.b16 %v48
    %v64 = vpack.c.b16 %v63, %v62
    %v69 = vunpack.c.l.b16 %v49
    %v70 = vunpack.c.l.b16 %v50
    %v71 = vunpack.c.l.b16 %v51
    %v72 = vunpack.c.l.b16 %v52
    %v73 = vpack.c.b16 %v70, %v69
    %v74 = vpack.c.b16 %v72, %v71
    %vm77 = vcmask 261120
    %v79 = vsel %vm77, %v64, 0
    %81 = vmatprep.subr.bf16.mxu0 0
    %82 = vmatpush1.bf16.msra.mxu0 0
    %83 = vmatprep.subr.bf16.mxu0 0
    %84 = vmatpush1.bf16.msra.mxu0 0
    %85 = vmatprep.subr.bf16.mxu0 0
    %86 = vmatpush1.bf16.msra.mxu0 0
    %87 = vmatprep.subr.bf16.mxu0 0
    %88 = vmatpush1.bf16.msra.mxu0 0
    %89 = vmatprep.subr.bf16.mxu0 0
    %90 = vmatpush1.bf16.msra.mxu0 0
    %91 = vmatprep.subr.bf16.mxu0 0
    %92 = vmatpush1.bf16.msra.mxu0 0
    %93 = vmatprep.subr.bf16.mxu0 0
    %94 = vmatpush1.bf16.msra.mxu0 %v74
    %95 = vmatprep.subr.bf16.mxu0 0
    %96 = vmatpush1.bf16.msra.mxu0 %v73
    %97 = vmatprep.subr.bf16.mxu0 0
    %98 = vmatpush2.bf16.msra.mxu0 0
    %99 = vmatprep.subr.bf16.mxu0 0
    %100 = vmatpush2.bf16.msra.mxu0 0
    %101 = vmatprep.subr.bf16.mxu0 0
    %102 = vmatpush2.bf16.msra.mxu0 0
    %103 = vmatprep.subr.bf16.mxu0 0
    %104 = vmatpush2.bf16.msra.mxu0 0
    %105 = vmatprep.subr.bf16.mxu0 0
    %106 = vmatpush2.bf16.msra.mxu0 0
    %107 = vmatprep.subr.bf16.mxu0 0
    %108 = vmatpush2.bf16.msra.mxu0 0
    %109 = vmatprep.subr.bf16.mxu0 0
    %110 = vmatpush2.bf16.msra.mxu0 0
    %111 = vmatprep.subr.bf16.mxu0 0
    %112 = vmatpush2.bf16.msra.mxu0 0
    %113 = vmatprep.mubr.bf16.mxu0 0
    %114 = vmatmul.mubr.bf16.gmra.mxu0 %v79
    %v115 = vpop.f32.mrf.mxu0
    %v116 = vadd.f32 %v58, %v115
    %v117 = vpop.f32.mrf.mxu0
    %v118 = vpop.f32.mrf.mxu0
    %v119 = vadd.f32 %v58, %v118
    %v120 = vpop.f32.mrf.mxu0
    %121 = vdwg.mxu0
    %v122 = vxor.u32 %v116, 2147483648
    %v123 = vxor.u32 %v119, 2147483648
    %v124 = vmul.f32 %v122, 1.442695
    %v125 = vpow.pop %v124
    %v126 = vmul.f32 %v123, 1.442695
    %v127 = vpow.pop %v126
    %v128 = vadd.f32 %v125, 1.0
    %v129 = vadd.f32 %v127, 1.0
    %v130 = vrcp.pop %v128
    %v131 = vmul.f32 1.0, %v130
    %v132 = vrcp.pop %v129
    %v133 = vmul.f32 1.0, %v132
    %v134 = vmul.f32 %v116, %v131
    %v135 = vmul.f32 %v119, %v133
    %v136 = vsel %vm77, %v134, 0.0
    %v137 = vrot.slane %v136, 4
    %v138 = vadd.f32 %v136, %v137
    %v139 = vrot.slane %v138, 2
    %v140 = vadd.f32 %v138, %v139
    %v141 = vrot.slane %v140, 1
    %v142 = vadd.f32 %v140, %v141
    %v143 = vsel %vm77, %v135, 0.0
    %v144 = vrot.slane %v143, 4
    %v145 = vadd.f32 %v143, %v144
    %v146 = vrot.slane %v145, 2
    %v147 = vadd.f32 %v145, %v146
    %v148 = vrot.slane %v147, 1
    %v149 = vadd.f32 %v147, %v148
    %v150 = vld [vmem:[%s3] sm:$0x1]
    %v152 = vlaneseq
    %v153 = vshrl.u32 %v152, 7
    %v154 = vsub.s32 0, %v153
    %v155 = vrot.slane %v150, %v154
    %v157 = vmul.f32 %v142, %v155
    %v158 = vmul.f32 %v149, %v155
    %v161 = vrot.slane %v158, 7
    %vm162 = vcmask 1041409
    %v163 = vsel %vm162, %v161, %v157
    %vm165 = vcmask 254976
    %v166 = vsel %vm165, %v163, 0.0
    %167 = vadd.xlane.f32.xlu0 %v166
    %v168 = vpop.xlane.xlu0 %167
    %169 = vxpose.xlu0.b32.start [1/16] %v168, 128
    %170 = vxpose.xlu0.b32.cont [2/16] 0.0, 128
    %171 = vxpose.xlu0.b32.cont [3/16] 0.0, 128
    %172 = vxpose.xlu0.b32.cont [4/16] 0.0, 128
    %173 = vxpose.xlu0.b32.cont [5/16] 0.0, 128
    %174 = vxpose.xlu0.b32.cont [6/16] 0.0, 128
    %175 = vxpose.xlu0.b32.cont [7/16] 0.0, 128
    %176 = vxpose.xlu0.b32.cont [8/16] 0.0, 128
    %177 = vxpose.xlu0.b32.cont [9/16] 0.0, 128
    %178 = vxpose.xlu0.b32.cont [10/16] 0.0, 128
    %179 = vxpose.xlu0.b32.cont [11/16] 0.0, 128
    %180 = vxpose.xlu0.b32.cont [12/16] 0.0, 128
    %181 = vxpose.xlu0.b32.cont [13/16] 0.0, 128
    %182 = vxpose.xlu0.b32.cont [14/16] 0.0, 128
    %183 = vxpose.xlu0.b32.cont [15/16] 0.0, 128
    %184 = vxpose.xlu0.b32.end [16/16] 0.0, 128
    %v185 = vpop.trf.xlu0
    %v186 = vpop.trf.xlu0
    %v187 = vpop.trf.xlu0
    %v188 = vpop.trf.xlu0
    %v189 = vpop.trf.xlu0
    %v190 = vpop.trf.xlu0
    %v191 = vpop.trf.xlu0
    %v192 = vpop.trf.xlu0
    %v193 = vpop.trf.xlu0
    %v194 = vpop.trf.xlu0
    %v195 = vpop.trf.xlu0
    %v196 = vpop.trf.xlu0
    %v197 = vpop.trf.xlu0
    %v198 = vpop.trf.xlu0
    %v199 = vpop.trf.xlu0
    %v200 = vpop.trf.xlu0
    %vm201 = vcmask 8192
    %202 = vst.msk [vmem:[#allocation7] sm:$0x1] %vm201, %v185
    // Predicated region
    $region26: #{tpu_custom_call.1} parent=1 // pred_check
      _
    $region27: #{tpu_custom_call.1} parent=1 // pred_check_branch
      %204 = sbr.rel (0) target = $region29
    $region28: #{tpu_custom_call.1} parent=1 // pred_region
      %s206 = ssub.s32 16, 16
      %207 = vsyncadd [#allocation4], %s206
      %s209 = sshll.u32 [#allocation7], 4
      %s210 = int_to_ptr.vmem [resolvable:$true] %s209
      %212 = dma.vmem_to_hbm [thread:$0]  %s210, 16, %s4, [#allocation4]
    $region29: #{tpu_custom_call.1} parent=1 // pred_fallthru
      _
    // Predicated region
    $region30: #{tpu_custom_call.1} parent=1 // pred_check
      _
    $region31: #{tpu_custom_call.1} parent=1 // pred_check_branch
      %214 = sbr.rel (0) target = $region33
    $region32: #{tpu_custom_call.1} parent=1 // pred_region
      %215 = dma.done [#allocation4], 16
    $region33: #{tpu_custom_call.1} parent=1 // pred_fallthru
      _
    %216 = vsyncpa [#allocation3], 1
    %217 = vsyncpa [#allocation6], 1
    %218 = vsyncpa [#allocation4], 1

</llo_original>
